<compile_context>
chip_gen: v7x
topology: tpu7x:2x2x1
jax: 0.10.0
libtpu: 0.0.40
codegen_flags: <defaults>
</compile_context>

<pallas_src>
import numpy as np
import jax
import jax.numpy as jnp
from jax.experimental import pallas as pl
from jax.experimental.pallas import tpu as pltpu


def _bilinear_interp_matrix(w_in: int, w_out: int) -> np.ndarray:
    """Matrix M (w_in, w_out) reproducing F.interpolate(mode='bilinear',
    align_corners=False) along width. Height interpolation is the identity in
    this module (target height == input height), so width-only is exact."""
    M = np.zeros((w_in, w_out), dtype=np.float32)
    scale = w_in / w_out
    for xo in range(w_out):
        src = (xo + 0.5) * scale - 0.5
        if src < 0.0:
            src = 0.0
        x0 = min(int(np.floor(src)), w_in - 1)
        x1 = min(x0 + 1, w_in - 1)
        lam = src - x0
        M[x0, xo] += 1.0 - lam
        M[x1, xo] += lam
    return M


def _pick_row_tile(h: int, c: int, wh: int, w: int, in_dtype,
                   budget_bytes: int = 12 << 20) -> int:
    """Largest row tile TH (divisor of h, sublane-aligned) whose double-buffered
    working set stays under a per-generation-safe VMEM budget (v7x: 64 MiB
    physical / 32 MiB scoped default -> keep well under)."""
    bpe = jnp.dtype(in_dtype).itemsize
    sub = 16 if bpe == 2 else 8
    cands = sorted({d for d in range(1, h + 1)
                    if h % d == 0 and (d % sub == 0 or d == h)}, reverse=True)
    for th in cands:
        est = (2 * (2 * c * th * wh * bpe)      # double-buffered f_re + f_im blocks
               + 2 * (c * th * w * 4)           # double-buffered output block
               + 2 * (wh * w * 4 + c * th * 4)  # residents (conservatively x2)
               + c * th * wh * 4)               # f32 scratch for the mixed spectrum
        if est <= budget_bytes:
            return th
    return cands[-1]


def _freq_kernel(f_re_ref, f_im_ref, m_ref, bias_ref, w_re_ref, w_im_ref,
                 o_ref, g_scr):
    # f_re_ref/f_im_ref: (1, c, TH, wh)  rfft2 real / imag parts (matmul_dtype)
    # m_ref:             (wh, w)         resident width-interp matrix (f32)
    # bias_ref:          (c*TH, 1)       per-row conv bias (f32)
    # w_re_ref/w_im_ref: (c, c)          1x1-conv weights in SMEM (f32 scalars)
    # o_ref:             (1, c, TH, w)   output block (f32)
    # g_scr:             (c*TH, wh)      f32 scratch for the mixed spectrum
    c = o_ref.shape[1]
    th = o_ref.shape[2]
    w = o_ref.shape[3]

    # Hoist the per-input-channel tiles once (kept in vregs across the unroll).
    f_re = [f_re_ref[0, k].astype(jnp.float32) for k in range(c)]
    f_im = [f_im_ref[0, k].astype(jnp.float32) for k in range(c)]

    # 1) Channel mix (1x1 conv, bias later) on the half-width spectrum as VPU
    #    broadcast-FMAs with SMEM scalar weights: with M=c, K=2c an MXU matmul
    #    would fill <3% of a row, while the VALU slots are otherwise idle here.
    # TODO(synk): for large c (>~16) this unroll should move onto the MXU.
    for oc in range(c):
        acc = w_re_ref[oc, 0] * f_re[0] + w_im_ref[oc, 0] * f_im[0]
        for k in range(1, c):
            acc = acc + w_re_ref[oc, k] * f_re[k] + w_im_ref[oc, k] * f_im[k]
        g_scr[pl.ds(oc * th, th), :] = acc

    # 2) Width bilinear interpolation: ONE lane-dense MXU matmul with the
    #    M-dimension = c*TH (full row fill), K = wh kept in f32 for accuracy.
    y = jnp.dot(g_scr[...], m_ref[...], preferred_element_type=jnp.float32)  # (c*TH, w)
    y = y + bias_ref[...]                       # broadcast (c*TH, 1) over lanes

    # (c*TH, w) -> (c, TH, w): layout-free split of the sublane-major dim.
    o_ref[0] = y.reshape(c, th, w).astype(o_ref.dtype)


def frequency_analysis(x, conv_w, conv_b, *, matmul_dtype=jnp.bfloat16):
    """Pallas implementation of FrequencyAnalysis.forward.

    x:      (b, c, h, w) any float dtype (cast to f32, like x.float())
    conv_w: (c, 2c, 1, 1) weight in the PyTorch (interleaved re/im) column layout
    conv_b: (c,)          bias
    matmul_dtype: dtype of the HBM-resident spectrum fed to the kernel.
        bfloat16 (default) halves post-FFT HBM traffic and is MXU/VPU-native on
        v5e, v6e and v7x; weights, bias, the interpolation matrix and all
        accumulation stay float32. Use jnp.float32 for bit-accurate results.
    returns (b, c, h, w) float32
    """
    b, c, h, w = x.shape
    wh = w // 2 + 1
    x = x.astype(jnp.float32)

    # TODO(synk): rfft2 has no Pallas primitive; it runs in XLA. The
    # interpolation + 1x1 conv hot path is fused in the Pallas kernel below.
    fft = jnp.fft.rfft2(x)                                    # (b, c, h, wh) c64
    # Real / imag passed separately (no concatenate -> no extra HBM copy).
    f_re = fft.real.astype(matmul_dtype)                      # (b, c, h, wh)
    f_im = fft.imag.astype(matmul_dtype)                      # (b, c, h, wh)

    # PyTorch's fft_real channel layout is interleaved [c0_re, c0_im, c1_re, ...]
    # -> split the 1x1-conv weight into re / im parts (kept f32, read from SMEM).
    w_full = conv_w.reshape(c, 2 * c).astype(jnp.float32)
    w_re = w_full[:, 0::2]                                    # (c, c)
    w_im = w_full[:, 1::2]                                    # (c, c)

    # Row tile: the single VMEM knob (smaller budget keeps v7x's 64 MiB happy).
    th = _pick_row_tile(h, c, wh, w, matmul_dtype)
    n_ht = h // th

    # Small resident width-interp matrix and a per-row expanded bias so the
    # kernel only needs 2-D broadcasts.
    m = jnp.asarray(_bilinear_interp_matrix(wh, w))           # (wh, w) f32
    bias_rows = jnp.repeat(conv_b.astype(jnp.float32), th).reshape(c * th, 1)

    bpe = jnp.dtype(matmul_dtype).itemsize
    est_vmem = (2 * (2 * c * th * wh * bpe) + 2 * (c * th * w * 4)
                + 2 * (wh * w * 4 + c * th * 4) + c * th * wh * 4 + (1 << 20))
    vmem_limit = int(min(max(2 * est_vmem, 4 << 20), 64 << 20))

    cost = pl.CostEstimate(
        flops=int(b * (4 * c * c * h * wh + 2 * c * h * wh * w)),
        transcendentals=0,
        bytes_accessed=int(2 * b * c * h * wh * bpe + b * c * h * w * 4
                           + wh * w * 4 + c * th * 4 + 2 * c * c * 4),
    )

    out = pl.pallas_call(
        _freq_kernel,
        out_shape=jax.ShapeDtypeStruct((b, c, h, w), jnp.float32),
        grid_spec=pltpu.PrefetchScalarGridSpec(
            num_scalar_prefetch=0,
            grid=(b, n_ht),                                   # b*(h/TH) parallel steps
            in_specs=[
                pl.BlockSpec((1, c, th, wh), lambda bi, hi: (bi, 0, hi, 0)),
                pl.BlockSpec((1, c, th, wh), lambda bi, hi: (bi, 0, hi, 0)),
                # Residents (tiny: (wh,w) and (c*TH,1)); double-buffering them
                # is negligible here, so pipeline_mode is left at the default.
                pl.BlockSpec((wh, w), lambda bi, hi: (0, 0)),
                pl.BlockSpec((c * th, 1), lambda bi, hi: (0, 0)),
                pl.BlockSpec(memory_space=pltpu.MemorySpace.SMEM),   # w_re scalars
                pl.BlockSpec(memory_space=pltpu.MemorySpace.SMEM),   # w_im scalars
            ],
            out_specs=pl.BlockSpec((1, c, th, w), lambda bi, hi: (bi, 0, hi, 0)),
            scratch_shapes=[pltpu.VMEM((c * th, wh), jnp.float32)],
        ),
        compiler_params=pltpu.CompilerParams(
            dimension_semantics=("parallel", "parallel"),     # megacore / 2-TC v7x
            vmem_limit_bytes=vmem_limit,
        ),
        cost_estimate=cost,
    )(f_re, f_im, m, bias_rows, w_re, w_im)

    return out                                                # (b, c, h, w) f32


def _reference(x, conv_w, conv_b):
    """Plain-JAX reference with the exact PyTorch (interleaved) layout."""
    b, c, h, w = x.shape
    wh = w // 2 + 1
    x = x.astype(jnp.float32)
    fft = jnp.fft.rfft2(x)
    fft_ri = jnp.stack([fft.real, fft.imag], axis=2).reshape(b, 2 * c, h, wh)
    M = jnp.asarray(_bilinear_interp_matrix(wh, w))
    interp = jnp.einsum("bkhv,vw->bkhw", fft_ri, M)
    W = conv_w.reshape(c, 2 * c).astype(jnp.float32)
    out = jnp.einsum("ok,bkhw->bohw", W, interp)
    return out + conv_b[None, :, None, None]


if __name__ == "__main__":
    b, c, h, w = 2, 4, 16, 16

    key = jax.random.PRNGKey(0)
    kx, kw, kb = jax.random.split(key, 3)
    x = jax.random.normal(kx, (b, c, h, w), dtype=jnp.float32)

    # deterministic parameter init (Conv2d(channels*2, channels, kernel_size=1))
    fan_in = 2 * c  # * 1 * 1
    bound = 1.0 / np.sqrt(fan_in)
    conv_w = jax.random.uniform(kw, (c, 2 * c, 1, 1), jnp.float32, -bound, bound)
    conv_b = jax.random.uniform(kb, (c,), jnp.float32, -bound, bound)

    ref = jax.block_until_ready(_reference(x, conv_w, conv_b))

    # Exact path (f32 spectrum): tight tolerance.
    out_f32 = jax.block_until_ready(
        frequency_analysis(x, conv_w, conv_b, matmul_dtype=jnp.float32))
    assert out_f32.shape == (b, c, h, w)
    assert np.allclose(np.asarray(out_f32), np.asarray(ref), atol=1e-4, rtol=1e-4)

    # Fast path (default bf16 spectrum, f32 weights/accumulate): loose sanity
    # check — single bf16 rounding of the FFT values only.
    out_bf16 = jax.block_until_ready(frequency_analysis(x, conv_w, conv_b))
    err = np.max(np.abs(np.asarray(out_bf16) - np.asarray(ref)))
    scale = np.max(np.abs(np.asarray(ref)))
    assert err <= 1e-2 * scale + 1e-1

    print("KERNEL_OK")
</pallas_src>

<mosaic_0001>
module attributes {stable_mosaic.version = 11 : i64} {
  func.func @_freq_kernel(%arg0: i32, %arg1: i32, %arg2: memref<1x4x16x9xf32, #tpu.memory_space<vmem>>, %arg3: memref<1x4x16x9xf32, #tpu.memory_space<vmem>>, %arg4: memref<9x16xf32, #tpu.memory_space<vmem>>, %arg5: memref<64x1xf32, #tpu.memory_space<vmem>>, %arg6: memref<4x4xf32, #tpu.memory_space<smem>>, %arg7: memref<4x4xf32, #tpu.memory_space<smem>>, %arg8: memref<1x4x16x16xf32, #tpu.memory_space<vmem>>, %arg9: memref<64x9xf32, #tpu.memory_space<vmem>>) attributes {dimension_semantics = [#tpu.dimension_semantics<parallel>, #tpu.dimension_semantics<parallel>], iteration_bounds = array<i64: 2, 1>, scalar_prefetch = 0 : i64, scratch_operands = 1 : i64, tpu.core_type = #tpu.core_type<tc>, window_params = [{transform_indices = @transform_0, window_bounds = array<i64: 1, 4, 16, 9>}, {transform_indices = @transform_1, window_bounds = array<i64: 1, 4, 16, 9>}, {pipeline_mode = #tpu.pipeline_mode<synchronous>, transform_indices = @transform_2, window_bounds = array<i64: 9, 16>}, {pipeline_mode = #tpu.pipeline_mode<synchronous>, transform_indices = @transform_3, window_bounds = array<i64: 64, 1>}, {transform_indices = @transform_4, window_bounds = array<i64: 4, 4>}, {transform_indices = @transform_5, window_bounds = array<i64: 4, 4>}, {transform_indices = @transform_6, window_bounds = array<i64: 1, 4, 16, 16>}]} {
    %c0 = arith.constant 0 : index
    %c0_0 = arith.constant 0 : index
    %c0_1 = arith.constant 0 : index
    %c0_2 = arith.constant 0 : index
    %0 = vector.load %arg2[%c0, %c0_0, %c0_1, %c0_2] : memref<1x4x16x9xf32, #tpu.memory_space<vmem>>, vector<1x1x16x9xf32>
    %1 = vector.shape_cast %0 : vector<1x1x16x9xf32> to vector<16x9xf32>
    %c0_3 = arith.constant 0 : index
    %c1 = arith.constant 1 : index
    %c0_4 = arith.constant 0 : index
    %c0_5 = arith.constant 0 : index
    %2 = vector.load %arg2[%c0_3, %c1, %c0_4, %c0_5] : memref<1x4x16x9xf32, #tpu.memory_space<vmem>>, vector<1x1x16x9xf32>
    %3 = vector.shape_cast %2 : vector<1x1x16x9xf32> to vector<16x9xf32>
    %c0_6 = arith.constant 0 : index
    %c2 = arith.constant 2 : index
    %c0_7 = arith.constant 0 : index
    %c0_8 = arith.constant 0 : index
    %4 = vector.load %arg2[%c0_6, %c2, %c0_7, %c0_8] : memref<1x4x16x9xf32, #tpu.memory_space<vmem>>, vector<1x1x16x9xf32>
    %5 = vector.shape_cast %4 : vector<1x1x16x9xf32> to vector<16x9xf32>
    %c0_9 = arith.constant 0 : index
    %c3 = arith.constant 3 : index
    %c0_10 = arith.constant 0 : index
    %c0_11 = arith.constant 0 : index
    %6 = vector.load %arg2[%c0_9, %c3, %c0_10, %c0_11] : memref<1x4x16x9xf32, #tpu.memory_space<vmem>>, vector<1x1x16x9xf32>
    %7 = vector.shape_cast %6 : vector<1x1x16x9xf32> to vector<16x9xf32>
    %c0_12 = arith.constant 0 : index
    %c0_13 = arith.constant 0 : index
    %c0_14 = arith.constant 0 : index
    %c0_15 = arith.constant 0 : index
    %8 = vector.load %arg3[%c0_12, %c0_13, %c0_14, %c0_15] : memref<1x4x16x9xf32, #tpu.memory_space<vmem>>, vector<1x1x16x9xf32>
    %9 = vector.shape_cast %8 : vector<1x1x16x9xf32> to vector<16x9xf32>
    %c0_16 = arith.constant 0 : index
    %c1_17 = arith.constant 1 : index
    %c0_18 = arith.constant 0 : index
    %c0_19 = arith.constant 0 : index
    %10 = vector.load %arg3[%c0_16, %c1_17, %c0_18, %c0_19] : memref<1x4x16x9xf32, #tpu.memory_space<vmem>>, vector<1x1x16x9xf32>
    %11 = vector.shape_cast %10 : vector<1x1x16x9xf32> to vector<16x9xf32>
    %c0_20 = arith.constant 0 : index
    %c2_21 = arith.constant 2 : index
    %c0_22 = arith.constant 0 : index
    %c0_23 = arith.constant 0 : index
    %12 = vector.load %arg3[%c0_20, %c2_21, %c0_22, %c0_23] : memref<1x4x16x9xf32, #tpu.memory_space<vmem>>, vector<1x1x16x9xf32>
    %13 = vector.shape_cast %12 : vector<1x1x16x9xf32> to vector<16x9xf32>
    %c0_24 = arith.constant 0 : index
    %c3_25 = arith.constant 3 : index
    %c0_26 = arith.constant 0 : index
    %c0_27 = arith.constant 0 : index
    %14 = vector.load %arg3[%c0_24, %c3_25, %c0_26, %c0_27] : memref<1x4x16x9xf32, #tpu.memory_space<vmem>>, vector<1x1x16x9xf32>
    %15 = vector.shape_cast %14 : vector<1x1x16x9xf32> to vector<16x9xf32>
    %c0_28 = arith.constant 0 : index
    %c0_29 = arith.constant 0 : index
    %16 = memref.load %arg6[%c0_28, %c0_29] : memref<4x4xf32, #tpu.memory_space<smem>>
    %17 = vector.broadcast %16 : f32 to vector<16x9xf32>
    %18 = arith.mulf %17, %1 : vector<16x9xf32>
    %c0_30 = arith.constant 0 : index
    %c0_31 = arith.constant 0 : index
    %19 = memref.load %arg7[%c0_30, %c0_31] : memref<4x4xf32, #tpu.memory_space<smem>>
    %20 = vector.broadcast %19 : f32 to vector<16x9xf32>
    %21 = arith.mulf %20, %9 : vector<16x9xf32>
    %22 = arith.addf %18, %21 : vector<16x9xf32>
    %c0_32 = arith.constant 0 : index
    %c1_33 = arith.constant 1 : index
    %23 = memref.load %arg6[%c0_32, %c1_33] : memref<4x4xf32, #tpu.memory_space<smem>>
    %24 = vector.broadcast %23 : f32 to vector<16x9xf32>
    %25 = arith.mulf %24, %3 : vector<16x9xf32>
    %26 = arith.addf %22, %25 : vector<16x9xf32>
    %c0_34 = arith.constant 0 : index
    %c1_35 = arith.constant 1 : index
    %27 = memref.load %arg7[%c0_34, %c1_35] : memref<4x4xf32, #tpu.memory_space<smem>>
    %28 = vector.broadcast %27 : f32 to vector<16x9xf32>
    %29 = arith.mulf %28, %11 : vector<16x9xf32>
    %30 = arith.addf %26, %29 : vector<16x9xf32>
    %c0_36 = arith.constant 0 : index
    %c2_37 = arith.constant 2 : index
    %31 = memref.load %arg6[%c0_36, %c2_37] : memref<4x4xf32, #tpu.memory_space<smem>>
    %32 = vector.broadcast %31 : f32 to vector<16x9xf32>
    %33 = arith.mulf %32, %5 : vector<16x9xf32>
    %34 = arith.addf %30, %33 : vector<16x9xf32>
    %c0_38 = arith.constant 0 : index
    %c2_39 = arith.constant 2 : index
    %35 = memref.load %arg7[%c0_38, %c2_39] : memref<4x4xf32, #tpu.memory_space<smem>>
    %36 = vector.broadcast %35 : f32 to vector<16x9xf32>
    %37 = arith.mulf %36, %13 : vector<16x9xf32>
    %38 = arith.addf %34, %37 : vector<16x9xf32>
    %c0_40 = arith.constant 0 : index
    %c3_41 = arith.constant 3 : index
    %39 = memref.load %arg6[%c0_40, %c3_41] : memref<4x4xf32, #tpu.memory_space<smem>>
    %40 = vector.broadcast %39 : f32 to vector<16x9xf32>
    %41 = arith.mulf %40, %7 : vector<16x9xf32>
    %42 = arith.addf %38, %41 : vector<16x9xf32>
    %c0_42 = arith.constant 0 : index
    %c3_43 = arith.constant 3 : index
    %43 = memref.load %arg7[%c0_42, %c3_43] : memref<4x4xf32, #tpu.memory_space<smem>>
    %44 = vector.broadcast %43 : f32 to vector<16x9xf32>
    %45 = arith.mulf %44, %15 : vector<16x9xf32>
    %46 = arith.addf %42, %45 : vector<16x9xf32>
    %c0_44 = arith.constant 0 : index
    %c0_45 = arith.constant 0 : index
    %47 = vector.load %arg9[%c0_44, %c0_45] : memref<64x9xf32, #tpu.memory_space<vmem>>, vector<16x9xf32>
    tpu.vector_store %arg9[%c0_44, %c0_45], %46 {strides = array<i32>} : memref<64x9xf32, #tpu.memory_space<vmem>>, vector<16x9xf32>,
    %c1_46 = arith.constant 1 : index
    %c0_47 = arith.constant 0 : index
    %48 = memref.load %arg6[%c1_46, %c0_47] : memref<4x4xf32, #tpu.memory_space<smem>>
    %49 = vector.broadcast %48 : f32 to vector<16x9xf32>
    %50 = arith.mulf %49, %1 : vector<16x9xf32>
    %c1_48 = arith.constant 1 : index
    %c0_49 = arith.constant 0 : index
    %51 = memref.load %arg7[%c1_48, %c0_49] : memref<4x4xf32, #tpu.memory_space<smem>>
    %52 = vector.broadcast %51 : f32 to vector<16x9xf32>
    %53 = arith.mulf %52, %9 : vector<16x9xf32>
    %54 = arith.addf %50, %53 : vector<16x9xf32>
    %c1_50 = arith.constant 1 : index
    %c1_51 = arith.constant 1 : index
    %55 = memref.load %arg6[%c1_50, %c1_51] : memref<4x4xf32, #tpu.memory_space<smem>>
    %56 = vector.broadcast %55 : f32 to vector<16x9xf32>
    %57 = arith.mulf %56, %3 : vector<16x9xf32>
    %58 = arith.addf %54, %57 : vector<16x9xf32>
    %c1_52 = arith.constant 1 : index
    %c1_53 = arith.constant 1 : index
    %59 = memref.load %arg7[%c1_52, %c1_53] : memref<4x4xf32, #tpu.memory_space<smem>>
    %60 = vector.broadcast %59 : f32 to vector<16x9xf32>
    %61 = arith.mulf %60, %11 : vector<16x9xf32>
    %62 = arith.addf %58, %61 : vector<16x9xf32>
    %c1_54 = arith.constant 1 : index
    %c2_55 = arith.constant 2 : index
    %63 = memref.load %arg6[%c1_54, %c2_55] : memref<4x4xf32, #tpu.memory_space<smem>>
    %64 = vector.broadcast %63 : f32 to vector<16x9xf32>
    %65 = arith.mulf %64, %5 : vector<16x9xf32>
    %66 = arith.addf %62, %65 : vector<16x9xf32>
    %c1_56 = arith.constant 1 : index
    %c2_57 = arith.constant 2 : index
    %67 = memref.load %arg7[%c1_56, %c2_57] : memref<4x4xf32, #tpu.memory_space<smem>>
    %68 = vector.broadcast %67 : f32 to vector<16x9xf32>
    %69 = arith.mulf %68, %13 : vector<16x9xf32>
    %70 = arith.addf %66, %69 : vector<16x9xf32>
    %c1_58 = arith.constant 1 : index
    %c3_59 = arith.constant 3 : index
    %71 = memref.load %arg6[%c1_58, %c3_59] : memref<4x4xf32, #tpu.memory_space<smem>>
    %72 = vector.broadcast %71 : f32 to vector<16x9xf32>
    %73 = arith.mulf %72, %7 : vector<16x9xf32>
    %74 = arith.addf %70, %73 : vector<16x9xf32>
    %c1_60 = arith.constant 1 : index
    %c3_61 = arith.constant 3 : index
    %75 = memref.load %arg7[%c1_60, %c3_61] : memref<4x4xf32, #tpu.memory_space<smem>>
    %76 = vector.broadcast %75 : f32 to vector<16x9xf32>
    %77 = arith.mulf %76, %15 : vector<16x9xf32>
    %78 = arith.addf %74, %77 : vector<16x9xf32>
    %c16 = arith.constant 16 : index
    %c0_62 = arith.constant 0 : index
    %79 = vector.load %arg9[%c16, %c0_62] : memref<64x9xf32, #tpu.memory_space<vmem>>, vector<16x9xf32>
    tpu.vector_store %arg9[%c16, %c0_62], %78 {strides = array<i32>} : memref<64x9xf32, #tpu.memory_space<vmem>>, vector<16x9xf32>,
    %c2_63 = arith.constant 2 : index
    %c0_64 = arith.constant 0 : index
    %80 = memref.load %arg6[%c2_63, %c0_64] : memref<4x4xf32, #tpu.memory_space<smem>>
    %81 = vector.broadcast %80 : f32 to vector<16x9xf32>
    %82 = arith.mulf %81, %1 : vector<16x9xf32>
    %c2_65 = arith.constant 2 : index
    %c0_66 = arith.constant 0 : index
    %83 = memref.load %arg7[%c2_65, %c0_66] : memref<4x4xf32, #tpu.memory_space<smem>>
    %84 = vector.broadcast %83 : f32 to vector<16x9xf32>
    %85 = arith.mulf %84, %9 : vector<16x9xf32>
    %86 = arith.addf %82, %85 : vector<16x9xf32>
    %c2_67 = arith.constant 2 : index
    %c1_68 = arith.constant 1 : index
    %87 = memref.load %arg6[%c2_67, %c1_68] : memref<4x4xf32, #tpu.memory_space<smem>>
    %88 = vector.broadcast %87 : f32 to vector<16x9xf32>
    %89 = arith.mulf %88, %3 : vector<16x9xf32>
    %90 = arith.addf %86, %89 : vector<16x9xf32>
    %c2_69 = arith.constant 2 : index
    %c1_70 = arith.constant 1 : index
    %91 = memref.load %arg7[%c2_69, %c1_70] : memref<4x4xf32, #tpu.memory_space<smem>>
    %92 = vector.broadcast %91 : f32 to vector<16x9xf32>
    %93 = arith.mulf %92, %11 : vector<16x9xf32>
    %94 = arith.addf %90, %93 : vector<16x9xf32>
    %c2_71 = arith.constant 2 : index
    %c2_72 = arith.constant 2 : index
    %95 = memref.load %arg6[%c2_71, %c2_72] : memref<4x4xf32, #tpu.memory_space<smem>>
    %96 = vector.broadcast %95 : f32 to vector<16x9xf32>
    %97 = arith.mulf %96, %5 : vector<16x9xf32>
    %98 = arith.addf %94, %97 : vector<16x9xf32>
    %c2_73 = arith.constant 2 : index
    %c2_74 = arith.constant 2 : index
    %99 = memref.load %arg7[%c2_73, %c2_74] : memref<4x4xf32, #tpu.memory_space<smem>>
    %100 = vector.broadcast %99 : f32 to vector<16x9xf32>
    %101 = arith.mulf %100, %13 : vector<16x9xf32>
    %102 = arith.addf %98, %101 : vector<16x9xf32>
    %c2_75 = arith.constant 2 : index
    %c3_76 = arith.constant 3 : index
    %103 = memref.load %arg6[%c2_75, %c3_76] : memref<4x4xf32, #tpu.memory_space<smem>>
    %104 = vector.broadcast %103 : f32 to vector<16x9xf32>
    %105 = arith.mulf %104, %7 : vector<16x9xf32>
    %106 = arith.addf %102, %105 : vector<16x9xf32>
    %c2_77 = arith.constant 2 : index
    %c3_78 = arith.constant 3 : index
    %107 = memref.load %arg7[%c2_77, %c3_78] : memref<4x4xf32, #tpu.memory_space<smem>>
    %108 = vector.broadcast %107 : f32 to vector<16x9xf32>
    %109 = arith.mulf %108, %15 : vector<16x9xf32>
    %110 = arith.addf %106, %109 : vector<16x9xf32>
    %c32 = arith.constant 32 : index
    %c0_79 = arith.constant 0 : index
    %111 = vector.load %arg9[%c32, %c0_79] : memref<64x9xf32, #tpu.memory_space<vmem>>, vector<16x9xf32>
    tpu.vector_store %arg9[%c32, %c0_79], %110 {strides = array<i32>} : memref<64x9xf32, #tpu.memory_space<vmem>>, vector<16x9xf32>,
    %c3_80 = arith.constant 3 : index
    %c0_81 = arith.constant 0 : index
    %112 = memref.load %arg6[%c3_80, %c0_81] : memref<4x4xf32, #tpu.memory_space<smem>>
    %113 = vector.broadcast %112 : f32 to vector<16x9xf32>
    %114 = arith.mulf %113, %1 : vector<16x9xf32>
    %c3_82 = arith.constant 3 : index
    %c0_83 = arith.constant 0 : index
    %115 = memref.load %arg7[%c3_82, %c0_83] : memref<4x4xf32, #tpu.memory_space<smem>>
    %116 = vector.broadcast %115 : f32 to vector<16x9xf32>
    %117 = arith.mulf %116, %9 : vector<16x9xf32>
    %118 = arith.addf %114, %117 : vector<16x9xf32>
    %c3_84 = arith.constant 3 : index
    %c1_85 = arith.constant 1 : index
    %119 = memref.load %arg6[%c3_84, %c1_85] : memref<4x4xf32, #tpu.memory_space<smem>>
    %120 = vector.broadcast %119 : f32 to vector<16x9xf32>
    %121 = arith.mulf %120, %3 : vector<16x9xf32>
    %122 = arith.addf %118, %121 : vector<16x9xf32>
    %c3_86 = arith.constant 3 : index
    %c1_87 = arith.constant 1 : index
    %123 = memref.load %arg7[%c3_86, %c1_87] : memref<4x4xf32, #tpu.memory_space<smem>>
    %124 = vector.broadcast %123 : f32 to vector<16x9xf32>
    %125 = arith.mulf %124, %11 : vector<16x9xf32>
    %126 = arith.addf %122, %125 : vector<16x9xf32>
    %c3_88 = arith.constant 3 : index
    %c2_89 = arith.constant 2 : index
    %127 = memref.load %arg6[%c3_88, %c2_89] : memref<4x4xf32, #tpu.memory_space<smem>>
    %128 = vector.broadcast %127 : f32 to vector<16x9xf32>
    %129 = arith.mulf %128, %5 : vector<16x9xf32>
    %130 = arith.addf %126, %129 : vector<16x9xf32>
    %c3_90 = arith.constant 3 : index
    %c2_91 = arith.constant 2 : index
    %131 = memref.load %arg7[%c3_90, %c2_91] : memref<4x4xf32, #tpu.memory_space<smem>>
    %132 = vector.broadcast %131 : f32 to vector<16x9xf32>
    %133 = arith.mulf %132, %13 : vector<16x9xf32>
    %134 = arith.addf %130, %133 : vector<16x9xf32>
    %c3_92 = arith.constant 3 : index
    %c3_93 = arith.constant 3 : index
    %135 = memref.load %arg6[%c3_92, %c3_93] : memref<4x4xf32, #tpu.memory_space<smem>>
    %136 = vector.broadcast %135 : f32 to vector<16x9xf32>
    %137 = arith.mulf %136, %7 : vector<16x9xf32>
    %138 = arith.addf %134, %137 : vector<16x9xf32>
    %c3_94 = arith.constant 3 : index
    %c3_95 = arith.constant 3 : index
    %139 = memref.load %arg7[%c3_94, %c3_95] : memref<4x4xf32, #tpu.memory_space<smem>>
    %140 = vector.broadcast %139 : f32 to vector<16x9xf32>
    %141 = arith.mulf %140, %15 : vector<16x9xf32>
    %142 = arith.addf %138, %141 : vector<16x9xf32>
    %c48 = arith.constant 48 : index
    %c0_96 = arith.constant 0 : index
    %143 = vector.load %arg9[%c48, %c0_96] : memref<64x9xf32, #tpu.memory_space<vmem>>, vector<16x9xf32>
    tpu.vector_store %arg9[%c48, %c0_96], %142 {strides = array<i32>} : memref<64x9xf32, #tpu.memory_space<vmem>>, vector<16x9xf32>,
    %c0_97 = arith.constant 0 : index
    %c0_98 = arith.constant 0 : index
    %144 = vector.load %arg9[%c0_97, %c0_98] : memref<64x9xf32, #tpu.memory_space<vmem>>, vector<64x9xf32>
    %c0_99 = arith.constant 0 : index
    %c0_100 = arith.constant 0 : index
    %145 = vector.load %arg4[%c0_99, %c0_100] : memref<9x16xf32, #tpu.memory_space<vmem>>, vector<9x16xf32>
    %cst = arith.constant dense<0.000000e+00> : vector<64x16xf32>
    %146 = tpu.matmul %144, %145, %cst {dimension_numbers = #tpu.dot_dimension_numbers<[1], [0], [0], [1], [0, 0, 1, 1], [], []>} : vector<64x9xf32>, vector<9x16xf32>, vector<64x16xf32> -> vector<64x16xf32>
    %c0_101 = arith.constant 0 : index
    %c0_102 = arith.constant 0 : index
    %147 = vector.load %arg5[%c0_101, %c0_102] : memref<64x1xf32, #tpu.memory_space<vmem>>, vector<64x1xf32>
    %148 = vector.broadcast %147 : vector<64x1xf32> to vector<64x16xf32>
    %149 = arith.addf %146, %148 : vector<64x16xf32>
    %150 = vector.shape_cast %149 : vector<64x16xf32> to vector<4x16x16xf32>
    %c0_103 = arith.constant 0 : index
    %c0_104 = arith.constant 0 : index
    %c0_105 = arith.constant 0 : index
    %c0_106 = arith.constant 0 : index
    %151 = vector.load %arg8[%c0_103, %c0_104, %c0_105, %c0_106] : memref<1x4x16x16xf32, #tpu.memory_space<vmem>>, vector<1x4x16x16xf32>
    %152 = vector.shape_cast %151 : vector<1x4x16x16xf32> to vector<4x16x16xf32>
    %153 = vector.shape_cast %150 : vector<4x16x16xf32> to vector<1x4x16x16xf32>
    tpu.vector_store %arg8[%c0_103, %c0_104, %c0_105, %c0_106], %153 {strides = array<i32>} : memref<1x4x16x16xf32, #tpu.memory_space<vmem>>, vector<1x4x16x16xf32>,
    return
  }
  func.func @transform_0(%arg0: i32, %arg1: i32) -> (i32, i32, i32, i32) {
    %c0_i32 = arith.constant 0 : i32
    %c0_i32_0 = arith.constant 0 : i32
    %c0_i32_1 = arith.constant 0 : i32
    return %arg0, %c0_i32, %arg1, %c0_i32_0 : i32, i32, i32, i32
  }
  func.func @transform_1(%arg0: i32, %arg1: i32) -> (i32, i32, i32, i32) {
    %c0_i32 = arith.constant 0 : i32
    %c0_i32_0 = arith.constant 0 : i32
    %c0_i32_1 = arith.constant 0 : i32
    return %arg0, %c0_i32, %arg1, %c0_i32_0 : i32, i32, i32, i32
  }
  func.func @transform_2(%arg0: i32, %arg1: i32) -> (i32, i32) {
    %c0_i32 = arith.constant 0 : i32
    %c0_i32_0 = arith.constant 0 : i32
    %c0_i32_1 = arith.constant 0 : i32
    return %c0_i32, %c0_i32_0 : i32, i32
  }
  func.func @transform_3(%arg0: i32, %arg1: i32) -> (i32, i32) {
    %c0_i32 = arith.constant 0 : i32
    %c0_i32_0 = arith.constant 0 : i32
    %c0_i32_1 = arith.constant 0 : i32
    return %c0_i32, %c0_i32_0 : i32, i32
  }
  func.func @transform_4(%arg0: i32, %arg1: i32) -> (i32, i32) {
    %c0_i32 = arith.constant 0 : i32
    %c0_i32_0 = arith.constant 0 : i32
    %c0_i32_1 = arith.constant 0 : i32
    return %c0_i32, %c0_i32_0 : i32, i32
  }
  func.func @transform_5(%arg0: i32, %arg1: i32) -> (i32, i32) {
    %c0_i32 = arith.constant 0 : i32
    %c0_i32_0 = arith.constant 0 : i32
    %c0_i32_1 = arith.constant 0 : i32
    return %c0_i32, %c0_i32_0 : i32, i32
  }
  func.func @transform_6(%arg0: i32, %arg1: i32) -> (i32, i32, i32, i32) {
    %c0_i32 = arith.constant 0 : i32
    %c0_i32_0 = arith.constant 0 : i32
    %c0_i32_1 = arith.constant 0 : i32
    return %arg0, %c0_i32, %arg1, %c0_i32_0 : i32, i32, i32, i32
  }
}

</mosaic_0001>

<llo_original>
// kernel: tpu_custom_call.1
$region0: #{tpu_custom_call.1}
  #allocation0 [shape = 'u32[]', space=smem, size = 0x4, offset = 0x4, fixed_abs, tag = 'smem constant byte address 0x4 - core index']
  #allocation1 [shape = 'u32[144,128]{1,0:T(1,128)}', space=vmem, size = 0x12000, scoped, tag = 'internal scratch']
  #allocation2 [shape = 'f32[64,9]{1,0:T(8,128)}', space=vmem, size = 0x8000, scoped, tag = 'scratch operand']
  %s0 = inlined_call_operand.vmem [shape: f32[2,4,16,9], index: 0, kind: input, shape index: {}]
  %s1 = inlined_call_operand.vmem [shape: f32[2,4,16,9], index: 1, kind: input, shape index: {}]
  %s2 = inlined_call_operand.vmem [shape: f32[9,16], index: 2, kind: input, shape index: {}]
  %s3 = inlined_call_operand.vmem [shape: f32[64,1], index: 3, kind: input, shape index: {}]
  %s4 = inlined_call_operand.vmem [shape: f32[4,4], index: 4, kind: input, shape index: {}]
  %s5 = inlined_call_operand.vmem [shape: f32[4,4], index: 5, kind: input, shape index: {}]
  %s6 = inlined_call_operand.hbm [shape: f32[2,4,16,16], index: 6, kind: output, shape index: {}]
  %s7 = sld [smem:[#allocation0]]
  $region65: #{tpu_custom_call.1} parent=0
    _
  %s9 = ssub.s32 1, %s7
  %s10 = scalar_select 0, %s9, %s7
  $region1: #{tpu_custom_call.1} parent=0
    #allocation3 [shape = 'u8[2048]{0}', space=smem, size = 0x800, scoped, tag = 'input window, operand 4, single buffered']
    #allocation4 [shape = 's32[2]{0}', space=sflag, size = 0x8, scoped, tag = 'scoped memory for tpu_custom_call.1']
    #allocation5 [shape = 's32[2]{0}', space=sflag, size = 0x8, scoped, tag = 'scoped memory for tpu_custom_call.1']
    #allocation6 [shape = 'u8[2048]{0}', space=smem, size = 0x800, scoped, tag = 'input window, operand 5, single buffered']
    #allocation7 [shape = 's32[1]{0}', space=sflag, size = 0x4, scoped, tag = 'scoped memory for tpu_custom_call.1']
    #allocation8 [shape = 'u8[65536]{0}', space=vmem, size = 0x10000, scoped, tag = 'output window, operand 0']
    %11 = vsyncpa [#allocation5], 0
    %12 = vsyncpa [#allocation7], 0
    %13 = vsyncpa [#allocation4], 0
    %s14 = scalar_lea.sflag [#allocation4], 1
    %15 = vsyncpa %s14, 0
    loop: start=0, step=1, limit=4
    $region2: #{tpu_custom_call.1} parent=1 // loop_pre_header
      _
    $region3: #{tpu_custom_call.1} parent=1 // loop_header
      %s17 = sphi 0, %s21
      %p18 = scmp.ge.s32.totalorder %s17, 4
      %s24 = sphi 0, %s36
      %s25 = sphi 0, %s32
      %s26 = sphi 0, %s24
      %s27 = sphi 0, %s25
      %s28 = sphi 0, %s26
      %s29 = sphi 0, %s27
      %s41 = sphi 0, %s43
      %s44 = sphi 0, %s41
      %s45 = sphi 0, %s44
      %s61 = sphi 0, %s45
      %s69 = sphi 0, %s71
      %s72 = sphi 0, %s69
      %s73 = sphi 0, %s72
      %s89 = sphi 0, %s73
      %s93 = sphi 0, %s93
      %s95 = sphi 0, %s93
      %s96 = sphi 0, %s95
      %s110 = sphi 0, %s96
      %s114 = sphi 0, %s114
      %s116 = sphi 0, %s114
      %s117 = sphi 0, %s116
      %s131 = sphi 0, %s117
      %s135 = sphi 0, %s135
      %s137 = sphi 0, %s135
      %s138 = sphi 0, %s137
      %s152 = sphi 0, %s138
      %s156 = sphi 0, %s156
      %s158 = sphi 0, %s156
      %s159 = sphi 0, %s158
      %s173 = sphi 0, %s159
      %s181 = sphi 0, %s183
      %s184 = sphi 0, %s181
      %s185 = sphi 0, %s184
      %s201 = sphi 0, %s185
    $region4: #{tpu_custom_call.1} parent=1 // loop_header_branch
      %20 = sbr.rel (%p18) target = $region8
    $region5: #{tpu_custom_call.1} parent=1 // loop_body
      %s22 = ssub.s32 %s17, 1
      %s23 = ssub.s32 %s17, 2
      %s30 = sadd.s32 1, %s25
      %p31 = scmp.ge.s32.totalorder %s30, 1
      %s32 = scalar_select %p31, 0, %s30
      %s33 = sadd.s32 1, %s24
      %s34 = scalar_select %p31, %s33, %s24
      %p35 = scmp.ge.s32.totalorder %s34, 2
      %s36 = scalar_select %p35, 0, %s34
      %s37 = ssub.s32 %s24, %s36
      %s38 = ssub.s32 %s25, %s32
      %s39 = sor.u32 %s37, %s38
      %p40 = scmp.eq.s32.totalorder %s39, 0
      %s42 = sadd.s32 %s41, 1
      %s43 = scalar_select %p40, %s41, %s42
      %p46 = pneg %p40
      %p47 = scmp.eq.s32.totalorder %s17, 1
      %p48 = por %p46, %p47
      %p49 = scmp.ne.s32.totalorder %s41, %s44
      %p50 = scmp.eq.s32.totalorder %s17, 0
      %p51 = por %p49, %p50
      %p52 = scmp.ne.s32.totalorder %s41, %s44
      %p53 = scmp.eq.s32.totalorder %s22, 1
      %p54 = por %p52, %p53
      %p55 = scmp.ne.s32.totalorder %s44, %s45
      %p56 = scmp.eq.s32.totalorder %s22, 0
      %p57 = por %p55, %p56
      %p58 = scmp.ne.s32.totalorder %s44, %s45
      %p59 = scmp.eq.s32.totalorder %s23, 1
      %p60 = por %p58, %p59
      %p62 = scmp.ne.s32.totalorder %s45, %s61
      %p63 = scmp.eq.s32.totalorder %s23, 0
      %p64 = por %p62, %p63
      %s65 = ssub.s32 %s24, %s36
      %s66 = ssub.s32 %s25, %s32
      %s67 = sor.u32 %s65, %s66
      %p68 = scmp.eq.s32.totalorder %s67, 0
      %s70 = sadd.s32 %s69, 1
      %s71 = scalar_select %p68, %s69, %s70
      %p74 = pneg %p68
      %p75 = scmp.eq.s32.totalorder %s17, 1
      %p76 = por %p74, %p75
      %p77 = scmp.ne.s32.totalorder %s69, %s72
      %p78 = scmp.eq.s32.totalorder %s17, 0
      %p79 = por %p77, %p78
      %p80 = scmp.ne.s32.totalorder %s69, %s72
      %p81 = scmp.eq.s32.totalorder %s22, 1
      %p82 = por %p80, %p81
      %p83 = scmp.ne.s32.totalorder %s72, %s73
      %p84 = scmp.eq.s32.totalorder %s22, 0
      %p85 = por %p83, %p84
      %p86 = scmp.ne.s32.totalorder %s72, %s73
      %p87 = scmp.eq.s32.totalorder %s23, 1
      %p88 = por %p86, %p87
      %p90 = scmp.ne.s32.totalorder %s73, %s89
      %p91 = scmp.eq.s32.totalorder %s23, 0
      %p92 = por %p90, %p91
      %s94 = sadd.s32 %s93, 1
      %p97 = scmp.eq.s32.totalorder %s17, 1
      %p98 = scmp.ne.s32.totalorder %s93, %s95
      %p99 = scmp.eq.s32.totalorder %s17, 0
      %p100 = por %p98, %p99
      %p101 = scmp.ne.s32.totalorder %s93, %s95
      %p102 = scmp.eq.s32.totalorder %s22, 1
      %p103 = por %p101, %p102
      %p104 = scmp.ne.s32.totalorder %s95, %s96
      %p105 = scmp.eq.s32.totalorder %s22, 0
      %p106 = por %p104, %p105
      %p107 = scmp.ne.s32.totalorder %s95, %s96
      %p108 = scmp.eq.s32.totalorder %s23, 1
      %p109 = por %p107, %p108
      %p111 = scmp.ne.s32.totalorder %s96, %s110
      %p112 = scmp.eq.s32.totalorder %s23, 0
      %p113 = por %p111, %p112
      %s115 = sadd.s32 %s114, 1
      %p118 = scmp.eq.s32.totalorder %s17, 1
      %p119 = scmp.ne.s32.totalorder %s114, %s116
      %p120 = scmp.eq.s32.totalorder %s17, 0
      %p121 = por %p119, %p120
      %p122 = scmp.ne.s32.totalorder %s114, %s116
      %p123 = scmp.eq.s32.totalorder %s22, 1
      %p124 = por %p122, %p123
      %p125 = scmp.ne.s32.totalorder %s116, %s117
      %p126 = scmp.eq.s32.totalorder %s22, 0
      %p127 = por %p125, %p126
      %p128 = scmp.ne.s32.totalorder %s116, %s117
      %p129 = scmp.eq.s32.totalorder %s23, 1
      %p130 = por %p128, %p129
      %p132 = scmp.ne.s32.totalorder %s117, %s131
      %p133 = scmp.eq.s32.totalorder %s23, 0
      %p134 = por %p132, %p133
      %s136 = sadd.s32 %s135, 1
      %p139 = scmp.eq.s32.totalorder %s17, 1
      %p140 = scmp.ne.s32.totalorder %s135, %s137
      %p141 = scmp.eq.s32.totalorder %s17, 0
      %p142 = por %p140, %p141
      %p143 = scmp.ne.s32.totalorder %s135, %s137
      %p144 = scmp.eq.s32.totalorder %s22, 1
      %p145 = por %p143, %p144
      %p146 = scmp.ne.s32.totalorder %s137, %s138
      %p147 = scmp.eq.s32.totalorder %s22, 0
      %p148 = por %p146, %p147
      %p149 = scmp.ne.s32.totalorder %s137, %s138
      %p150 = scmp.eq.s32.totalorder %s23, 1
      %p151 = por %p149, %p150
      %p153 = scmp.ne.s32.totalorder %s138, %s152
      %p154 = scmp.eq.s32.totalorder %s23, 0
      %p155 = por %p153, %p154
      %s157 = sadd.s32 %s156, 1
      %p160 = scmp.eq.s32.totalorder %s17, 1
      %p161 = scmp.ne.s32.totalorder %s156, %s158
      %p162 = scmp.eq.s32.totalorder %s17, 0
      %p163 = por %p161, %p162
      %p164 = scmp.ne.s32.totalorder %s156, %s158
      %p165 = scmp.eq.s32.totalorder %s22, 1
      %p166 = por %p164, %p165
      %p167 = scmp.ne.s32.totalorder %s158, %s159
      %p168 = scmp.eq.s32.totalorder %s22, 0
      %p169 = por %p167, %p168
      %p170 = scmp.ne.s32.totalorder %s158, %s159
      %p171 = scmp.eq.s32.totalorder %s23, 1
      %p172 = por %p170, %p171
      %p174 = scmp.ne.s32.totalorder %s159, %s173
      %p175 = scmp.eq.s32.totalorder %s23, 0
      %p176 = por %p174, %p175
      %s177 = ssub.s32 %s24, %s36
      %s178 = ssub.s32 %s25, %s32
      %s179 = sor.u32 %s177, %s178
      %p180 = scmp.eq.s32.totalorder %s179, 0
      %s182 = sadd.s32 %s181, 1
      %s183 = scalar_select %p180, %s181, %s182
      %p186 = pneg %p180
      %p187 = scmp.eq.s32.totalorder %s17, 1
      %p188 = por %p186, %p187
      %p189 = scmp.ne.s32.totalorder %s181, %s184
      %p190 = scmp.eq.s32.totalorder %s17, 0
      %p191 = por %p189, %p190
      %p192 = scmp.ne.s32.totalorder %s181, %s184
      %p193 = scmp.eq.s32.totalorder %s22, 1
      %p194 = por %p192, %p193
      %p195 = scmp.ne.s32.totalorder %s184, %s185
      %p196 = scmp.eq.s32.totalorder %s22, 0
      %p197 = por %p195, %p196
      %p198 = scmp.ne.s32.totalorder %s184, %s185
      %p199 = scmp.eq.s32.totalorder %s23, 1
      %p200 = por %p198, %p199
      %p202 = scmp.ne.s32.totalorder %s185, %s201
      %p203 = scmp.eq.s32.totalorder %s23, 0
      %p204 = por %p202, %p203
      %p205 = scmp.le.s32.totalorder 1, %s17
      %p206 = scmp.lt.s32.totalorder %s17, 3
      %p207 = pnand %p205, %p206
      %p208 = pneg %p207
      // Predicated region
      $region9: #{tpu_custom_call.1} parent=5 // pred_check
        _
      $region10: #{tpu_custom_call.1} parent=5 // pred_check_branch
        %210 = sbr.rel (%p207) target = $region12
      $region11: #{tpu_custom_call.1} parent=5 // pred_region
        %s211 = ssub.s32 %s17, 1
        // Predicated region
        $region13: #{tpu_custom_call.1} parent=11 // pred_check
          %p212 = pneg %p106
        $region14: #{tpu_custom_call.1} parent=11 // pred_check_branch
          %214 = sbr.rel (%p212) target = $region16
        $region15: #{tpu_custom_call.1} parent=11 // pred_region
          _
        $region16: #{tpu_custom_call.1} parent=11 // pred_fallthru
          _
        // Predicated region
        $region17: #{tpu_custom_call.1} parent=11 // pred_check
          %p215 = pneg %p127
        $region18: #{tpu_custom_call.1} parent=11 // pred_check_branch
          %217 = sbr.rel (%p215) target = $region20
        $region19: #{tpu_custom_call.1} parent=11 // pred_region
          _
        $region20: #{tpu_custom_call.1} parent=11 // pred_fallthru
          _
        // Predicated region
        $region21: #{tpu_custom_call.1} parent=11 // pred_check
          %p218 = pneg %p148
        $region22: #{tpu_custom_call.1} parent=11 // pred_check_branch
          %220 = sbr.rel (%p218) target = $region24
        $region23: #{tpu_custom_call.1} parent=11 // pred_region
          %s222 = ssub.s32 64, 64
          %223 = vsyncadd [#allocation5], %s222
          %s225 = sshll.u32 %s4, 4
          %s226 = int_to_ptr.vmem [resolvable:$true] %s225
          %228 = dma.vmem_to_smem %s226, 64, [#allocation3], [#allocation5]
        $region24: #{tpu_custom_call.1} parent=11 // pred_fallthru
          _
        // Predicated region
        $region25: #{tpu_custom_call.1} parent=11 // pred_check
          %p229 = pneg %p169
        $region26: #{tpu_custom_call.1} parent=11 // pred_check_branch
          %231 = sbr.rel (%p229) target = $region28
        $region27: #{tpu_custom_call.1} parent=11 // pred_region
          %s233 = ssub.s32 64, 64
          %234 = vsyncadd [#allocation7], %s233
          %s236 = sshll.u32 %s5, 4
          %s237 = int_to_ptr.vmem [resolvable:$true] %s236
          %239 = dma.vmem_to_smem %s237, 64, [#allocation6], [#allocation7]
        $region28: #{tpu_custom_call.1} parent=11 // pred_fallthru
          _
      $region12: #{tpu_custom_call.1} parent=5 // pred_fallthru
        _
      %p240 = scmp.lt.s32.totalorder %s17, 2
      // Predicated region
      $region29: #{tpu_custom_call.1} parent=5 // pred_check
        %p241 = pneg %p240
      $region30: #{tpu_custom_call.1} parent=5 // pred_check_branch
        %243 = sbr.rel (%p241) target = $region32
      $region31: #{tpu_custom_call.1} parent=5 // pred_region
        // Predicated region
        $region33: #{tpu_custom_call.1} parent=31 // pred_check
          %p244 = pneg %p51
        $region34: #{tpu_custom_call.1} parent=31 // pred_check_branch
          %246 = sbr.rel (%p244) target = $region36
        $region35: #{tpu_custom_call.1} parent=31 // pred_region
          %s247 = smul.u32 2, %s25
          %p248 = scmp.lt.s32.totalorder %s24, 1
          %s249 = scalar_select %p248, %s24, 1
          %p250 = scmp.lt.s32.totalorder %s247, 1
          %s251 = scalar_select %p250, %s247, 1
          %s252 = smul.addr %s249, 8
          %s253 = sadd.s32 %s251, %s252
          %s254 = smul.addr %s253, 8
          %s255 = scalar_lea.vmem %s0, %s254
          %s256 = smul.u32 2, %s25
        $region36: #{tpu_custom_call.1} parent=31 // pred_fallthru
          _
        // Predicated region
        $region37: #{tpu_custom_call.1} parent=31 // pred_check
          %p257 = pneg %p79
        $region38: #{tpu_custom_call.1} parent=31 // pred_check_branch
          %259 = sbr.rel (%p257) target = $region40
        $region39: #{tpu_custom_call.1} parent=31 // pred_region
          %s260 = smul.u32 2, %s25
          %p261 = scmp.lt.s32.totalorder %s24, 1
          %s262 = scalar_select %p261, %s24, 1
          %p263 = scmp.lt.s32.totalorder %s260, 1
          %s264 = scalar_select %p263, %s260, 1
          %s265 = smul.addr %s262, 8
          %s266 = sadd.s32 %s264, %s265
          %s267 = smul.addr %s266, 8
          %s268 = scalar_lea.vmem %s1, %s267
          %s269 = smul.u32 2, %s25
        $region40: #{tpu_custom_call.1} parent=31 // pred_fallthru
          _
      $region32: #{tpu_custom_call.1} parent=5 // pred_fallthru
        _
      %p270 = scmp.le.s32.totalorder 1, %s17
      %p271 = scmp.lt.s32.totalorder %s17, 3
      %p272 = pnand %p270, %p271
      %p273 = pneg %p272
      // Predicated region
      $region41: #{tpu_custom_call.1} parent=5 // pred_check
        _
      $region42: #{tpu_custom_call.1} parent=5 // pred_check_branch
        %275 = sbr.rel (%p272) target = $region44
      $region43: #{tpu_custom_call.1} parent=5 // pred_region
        %s276 = ssub.s32 %s17, 1
        // Predicated region
        $region45: #{tpu_custom_call.1} parent=43 // pred_check
          %p277 = pneg %p148
        $region46: #{tpu_custom_call.1} parent=43 // pred_check_branch
          %279 = sbr.rel (%p277) target = $region48
        $region47: #{tpu_custom_call.1} parent=43 // pred_region
          %280 = dma.done [#allocation5], 64
        $region48: #{tpu_custom_call.1} parent=43 // pred_fallthru
          _
        // Predicated region
        $region49: #{tpu_custom_call.1} parent=43 // pred_check
          %p281 = pneg %p169
        $region50: #{tpu_custom_call.1} parent=43 // pred_check_branch
          %283 = sbr.rel (%p281) target = $region52
        $region51: #{tpu_custom_call.1} parent=43 // pred_region
          %284 = dma.done [#allocation7], 64
        $region52: #{tpu_custom_call.1} parent=43 // pred_fallthru
          _
        %285 = sfence
        %s286 = smul.u32 2, %s27
        %p287 = scmp.lt.s32.totalorder %s26, 1
        %s288 = scalar_select %p287, %s26, 1
        %p289 = scmp.lt.s32.totalorder %s286, 1
        %s290 = scalar_select %p289, %s286, 1
        %s291 = smul.addr %s288, 8
        %s292 = sadd.s32 %s290, %s291
        %s293 = smul.addr %s292, 8
        %s294 = scalar_lea.vmem %s0, %s293
        %p295 = pneg %p57
        %p296 = pneg %p54
        %s297 = smul.u32 2, %s27
        %p298 = scmp.lt.s32.totalorder %s26, 1
        %s299 = scalar_select %p298, %s26, 1
        %p300 = scmp.lt.s32.totalorder %s297, 1
        %s301 = scalar_select %p300, %s297, 1
        %s302 = smul.addr %s299, 8
        %s303 = sadd.s32 %s301, %s302
        %s304 = smul.addr %s303, 8
        %s305 = scalar_lea.vmem %s1, %s304
        %p306 = pneg %p85
        %p307 = pneg %p82
        %p308 = pneg %p106
        %p309 = pneg %p103
        %p310 = pneg %p127
        %p311 = pneg %p124
        %p312 = pneg %p148
        %p313 = pneg %p145
        %p314 = pneg %p169
        %p315 = pneg %p166
        %p316 = pneg %p197
        %p317 = pneg %p194
        %s318 = sand.u32 %s184, 1
        %s319 = scalar_lea.sflag [#allocation4], %s318
        %s320 = sand.u32 %s184, 1
        %s321 = smul.addr %s320, 64
        %s322 = scalar_lea.vmem [#allocation8], %s321
        %s323 = smul.u32 2, %s27
        %p324 = scmp.lt.s32.totalorder %s26, 1
        %s325 = scalar_select %p324, %s26, 1
        %p326 = scmp.lt.s32.totalorder %s323, 1
        %s327 = scalar_select %p326, %s323, 1
        %s328 = smul.addr %s325, 8
        %s329 = sadd.s32 %s327, %s328
        %s330 = smul.addr %s329, 8
        %s331 = scalar_lea.vmem %s0, %s330
        %s332 = smul.u32 2, %s27
        %s333 = smul.u32 2, %s27
        %p334 = scmp.lt.s32.totalorder %s26, 1
        %s335 = scalar_select %p334, %s26, 1
        %p336 = scmp.lt.s32.totalorder %s333, 1
        %s337 = scalar_select %p336, %s333, 1
        %s338 = smul.addr %s335, 8
        %s339 = sadd.s32 %s337, %s338
        %s340 = smul.addr %s339, 8
        %s341 = scalar_lea.vmem %s1, %s340
        %s342 = smul.u32 2, %s27
        %s343 = smul.u32 2, %s27
        %v344 = vld [vmem:[%s331] sm:$0xff]
        %v345 = vld [vmem:[%s331 + $0x8] sm:$0xff]
        %s346 = scalar_lea.vmem %s331, 16
        %v347 = vld [vmem:[%s346] sm:$0xff]
        %v348 = vld [vmem:[%s346 + $0x8] sm:$0xff]
        %s349 = scalar_lea.vmem %s331, 32
        %v350 = vld [vmem:[%s349] sm:$0xff]
        %v351 = vld [vmem:[%s349 + $0x8] sm:$0xff]
        %s352 = scalar_lea.vmem %s331, 48
        %v353 = vld [vmem:[%s352] sm:$0xff]
        %v354 = vld [vmem:[%s352 + $0x8] sm:$0xff]
        %v355 = vld [vmem:[%s341] sm:$0xff]
        %v356 = vld [vmem:[%s341 + $0x8] sm:$0xff]
        %s357 = scalar_lea.vmem %s341, 16
        %v358 = vld [vmem:[%s357] sm:$0xff]
        %v359 = vld [vmem:[%s357 + $0x8] sm:$0xff]
        %s360 = scalar_lea.vmem %s341, 32
        %v361 = vld [vmem:[%s360] sm:$0xff]
        %v362 = vld [vmem:[%s360 + $0x8] sm:$0xff]
        %s363 = scalar_lea.vmem %s341, 48
        %v364 = vld [vmem:[%s363] sm:$0xff]
        %v365 = vld [vmem:[%s363 + $0x8] sm:$0xff]
        %s366 = sld [smem:[#allocation3]]
        %v367 = vstv %s366
        %v368 = vmul.f32 %v367, %v344
        %v369 = vmul.f32 %v367, %v345
        %s370 = sld [smem:[#allocation6]]
        %v371 = vstv %s370
        %v372 = vmul.f32 %v371, %v355
        %v373 = vmul.f32 %v371, %v356
        %v374 = vadd.f32 %v368, %v372
        %v375 = vadd.f32 %v369, %v373
        %s376 = sld [smem:[#allocation3 + $0x1]]
        %v377 = vstv %s376
        %v378 = vmul.f32 %v377, %v347
        %v379 = vmul.f32 %v377, %v348
        %v380 = vadd.f32 %v374, %v378
        %v381 = vadd.f32 %v375, %v379
        %s382 = sld [smem:[#allocation6 + $0x1]]
        %v383 = vstv %s382
        %v384 = vmul.f32 %v383, %v358
        %v385 = vmul.f32 %v383, %v359
        %v386 = vadd.f32 %v380, %v384
        %v387 = vadd.f32 %v381, %v385
        %s388 = sld [smem:[#allocation3 + $0x2]]
        %v389 = vstv %s388
        %v390 = vmul.f32 %v389, %v350
        %v391 = vmul.f32 %v389, %v351
        %v392 = vadd.f32 %v386, %v390
        %v393 = vadd.f32 %v387, %v391
        %s394 = sld [smem:[#allocation6 + $0x2]]
        %v395 = vstv %s394
        %v396 = vmul.f32 %v395, %v361
        %v397 = vmul.f32 %v395, %v362
        %v398 = vadd.f32 %v392, %v396
        %v399 = vadd.f32 %v393, %v397
        %s400 = sld [smem:[#allocation3 + $0x3]]
        %v401 = vstv %s400
        %v402 = vmul.f32 %v401, %v353
        %v403 = vmul.f32 %v401, %v354
        %v404 = vadd.f32 %v398, %v402
        %v405 = vadd.f32 %v399, %v403
        %s406 = sld [smem:[#allocation6 + $0x3]]
        %v407 = vstv %s406
        %v408 = vmul.f32 %v407, %v364
        %v409 = vmul.f32 %v407, %v365
        %v410 = vadd.f32 %v404, %v408
        %v411 = vadd.f32 %v405, %v409
        %vm412 = vcmask 72704
        %413 = vst.msk [vmem:[#allocation2] sm:$0xff] %vm412, %v410
        %414 = vst.msk [vmem:[#allocation2 + $0x8] sm:$0xff] %vm412, %v411
        %s415 = sld [smem:[#allocation3 + $0x80]]
        %v416 = vstv %s415
        %v417 = vmul.f32 %v416, %v344
        %v418 = vmul.f32 %v416, %v345
        %s419 = sld [smem:[#allocation6 + $0x80]]
        %v420 = vstv %s419
        %v421 = vmul.f32 %v420, %v355
        %v422 = vmul.f32 %v420, %v356
        %v423 = vadd.f32 %v417, %v421
        %v424 = vadd.f32 %v418, %v422
        %s425 = sld [smem:[#allocation3 + $0x81]]
        %v426 = vstv %s425
        %v427 = vmul.f32 %v426, %v347
        %v428 = vmul.f32 %v426, %v348
        %v429 = vadd.f32 %v423, %v427
        %v430 = vadd.f32 %v424, %v428
        %s431 = sld [smem:[#allocation6 + $0x81]]
        %v432 = vstv %s431
        %v433 = vmul.f32 %v432, %v358
        %v434 = vmul.f32 %v432, %v359
        %v435 = vadd.f32 %v429, %v433
        %v436 = vadd.f32 %v430, %v434
        %s437 = sld [smem:[#allocation3 + $0x82]]
        %v438 = vstv %s437
        %v439 = vmul.f32 %v438, %v350
        %v440 = vmul.f32 %v438, %v351
        %v441 = vadd.f32 %v435, %v439
        %v442 = vadd.f32 %v436, %v440
        %s443 = sld [smem:[#allocation6 + $0x82]]
        %v444 = vstv %s443
        %v445 = vmul.f32 %v444, %v361
        %v446 = vmul.f32 %v444, %v362
        %v447 = vadd.f32 %v441, %v445
        %v448 = vadd.f32 %v442, %v446
        %s449 = sld [smem:[#allocation3 + $0x83]]
        %v450 = vstv %s449
        %v451 = vmul.f32 %v450, %v353
        %v452 = vmul.f32 %v450, %v354
        %v453 = vadd.f32 %v447, %v451
        %v454 = vadd.f32 %v448, %v452
        %s455 = sld [smem:[#allocation6 + $0x83]]
        %v456 = vstv %s455
        %v457 = vmul.f32 %v456, %v364
        %v458 = vmul.f32 %v456, %v365
        %v459 = vadd.f32 %v453, %v457
        %v460 = vadd.f32 %v454, %v458
        %461 = vst.msk [vmem:[#allocation2 + $0x10] sm:$0xff] %vm412, %v459
        %462 = vst.msk [vmem:[#allocation2 + $0x18] sm:$0xff] %vm412, %v460
        %s463 = sld [smem:[#allocation3 + $0x100]]
        %v464 = vstv %s463
        %v465 = vmul.f32 %v464, %v344
        %v466 = vmul.f32 %v464, %v345
        %s467 = sld [smem:[#allocation6 + $0x100]]
        %v468 = vstv %s467
        %v469 = vmul.f32 %v468, %v355
        %v470 = vmul.f32 %v468, %v356
        %v471 = vadd.f32 %v465, %v469
        %v472 = vadd.f32 %v466, %v470
        %s473 = sld [smem:[#allocation3 + $0x101]]
        %v474 = vstv %s473
        %v475 = vmul.f32 %v474, %v347
        %v476 = vmul.f32 %v474, %v348
        %v477 = vadd.f32 %v471, %v475
        %v478 = vadd.f32 %v472, %v476
        %s479 = sld [smem:[#allocation6 + $0x101]]
        %v480 = vstv %s479
        %v481 = vmul.f32 %v480, %v358
        %v482 = vmul.f32 %v480, %v359
        %v483 = vadd.f32 %v477, %v481
        %v484 = vadd.f32 %v478, %v482
        %s485 = sld [smem:[#allocation3 + $0x102]]
        %v486 = vstv %s485
        %v487 = vmul.f32 %v486, %v350
        %v488 = vmul.f32 %v486, %v351
        %v489 = vadd.f32 %v483, %v487
        %v490 = vadd.f32 %v484, %v488
        %s491 = sld [smem:[#allocation6 + $0x102]]
        %v492 = vstv %s491
        %v493 = vmul.f32 %v492, %v361
        %v494 = vmul.f32 %v492, %v362
        %v495 = vadd.f32 %v489, %v493
        %v496 = vadd.f32 %v490, %v494
        %s497 = sld [smem:[#allocation3 + $0x103]]
        %v498 = vstv %s497
        %v499 = vmul.f32 %v498, %v353
        %v500 = vmul.f32 %v498, %v354
        %v501 = vadd.f32 %v495, %v499
        %v502 = vadd.f32 %v496, %v500
        %s503 = sld [smem:[#allocation6 + $0x103]]
        %v504 = vstv %s503
        %v505 = vmul.f32 %v504, %v364
        %v506 = vmul.f32 %v504, %v365
        %v507 = vadd.f32 %v501, %v505
        %v508 = vadd.f32 %v502, %v506
        %509 = vst.msk [vmem:[#allocation2 + $0x20] sm:$0xff] %vm412, %v507
        %510 = vst.msk [vmem:[#allocation2 + $0x28] sm:$0xff] %vm412, %v508
        %s511 = sld [smem:[#allocation3 + $0x180]]
        %v512 = vstv %s511
        %v513 = vmul.f32 %v512, %v344
        %v514 = vmul.f32 %v512, %v345
        %s515 = sld [smem:[#allocation6 + $0x180]]
        %v516 = vstv %s515
        %v517 = vmul.f32 %v516, %v355
        %v518 = vmul.f32 %v516, %v356
        %v519 = vadd.f32 %v513, %v517
        %v520 = vadd.f32 %v514, %v518
        %s521 = sld [smem:[#allocation3 + $0x181]]
        %v522 = vstv %s521
        %v523 = vmul.f32 %v522, %v347
        %v524 = vmul.f32 %v522, %v348
        %v525 = vadd.f32 %v519, %v523
        %v526 = vadd.f32 %v520, %v524
        %s527 = sld [smem:[#allocation6 + $0x181]]
        %v528 = vstv %s527
        %v529 = vmul.f32 %v528, %v358
        %v530 = vmul.f32 %v528, %v359
        %v531 = vadd.f32 %v525, %v529
        %v532 = vadd.f32 %v526, %v530
        %s533 = sld [smem:[#allocation3 + $0x182]]
        %v534 = vstv %s533
        %v535 = vmul.f32 %v534, %v350
        %v536 = vmul.f32 %v534, %v351
        %v537 = vadd.f32 %v531, %v535
        %v538 = vadd.f32 %v532, %v536
        %s539 = sld [smem:[#allocation6 + $0x182]]
        %v540 = vstv %s539
        %v541 = vmul.f32 %v540, %v361
        %v542 = vmul.f32 %v540, %v362
        %v543 = vadd.f32 %v537, %v541
        %v544 = vadd.f32 %v538, %v542
        %s545 = sld [smem:[#allocation3 + $0x183]]
        %v546 = vstv %s545
        %v547 = vmul.f32 %v546, %v353
        %v548 = vmul.f32 %v546, %v354
        %v549 = vadd.f32 %v543, %v547
        %v550 = vadd.f32 %v544, %v548
        %s551 = sld [smem:[#allocation6 + $0x183]]
        %v552 = vstv %s551
        %v553 = vmul.f32 %v552, %v364
        %v554 = vmul.f32 %v552, %v365
        %v555 = vadd.f32 %v549, %v553
        %v556 = vadd.f32 %v550, %v554
        %557 = vst.msk [vmem:[#allocation2 + $0x30] sm:$0xff] %vm412, %v555
        %558 = vst.msk [vmem:[#allocation2 + $0x38] sm:$0xff] %vm412, %v556
        %v559 = vld [vmem:[#allocation2] sm:$0xff]
        %v560 = vld [vmem:[#allocation2 + $0x8] sm:$0xff]
        %v561 = vld [vmem:[#allocation2 + $0x10] sm:$0xff]
        %v562 = vld [vmem:[#allocation2 + $0x18] sm:$0xff]
        %v563 = vld [vmem:[#allocation2 + $0x20] sm:$0xff]
        %v564 = vld [vmem:[#allocation2 + $0x28] sm:$0xff]
        %v565 = vld [vmem:[#allocation2 + $0x30] sm:$0xff]
        %v566 = vld [vmem:[#allocation2 + $0x38] sm:$0xff]
        %v567 = vld [vmem:[%s2] sm:$0xff]
        %v568 = vld [vmem:[%s2 + $0x8] sm:$0x1]
        %v569 = vld [vmem:[%s3] sm:$0xff]
        %v570 = vld [vmem:[%s3 + $0x8] sm:$0xff]
        %v571 = vld [vmem:[%s3 + $0x10] sm:$0xff]
        %v572 = vld [vmem:[%s3 + $0x18] sm:$0xff]
        %v573 = vld [vmem:[%s3 + $0x20] sm:$0xff]
        %v574 = vld [vmem:[%s3 + $0x28] sm:$0xff]
        %v575 = vld [vmem:[%s3 + $0x30] sm:$0xff]
        %v576 = vld [vmem:[%s3 + $0x38] sm:$0xff]
        %578 = vset.pattern.permute.xlu0 0
        %579 = vperm.xlu0 %578, %v569
        %v580 = vpop.permute.xlu0 %579
        %583 = vset.pattern.permute.xlu0 0
        %584 = vperm.xlu0 %583, %v570
        %v585 = vpop.permute.xlu0 %584
        %588 = vset.pattern.permute.xlu0 0
        %589 = vperm.xlu0 %588, %v571
        %v590 = vpop.permute.xlu0 %589
        %593 = vset.pattern.permute.xlu0 0
        %594 = vperm.xlu0 %593, %v572
        %v595 = vpop.permute.xlu0 %594
        %598 = vset.pattern.permute.xlu0 0
        %599 = vperm.xlu0 %598, %v573
        %v600 = vpop.permute.xlu0 %599
        %603 = vset.pattern.permute.xlu0 0
        %604 = vperm.xlu0 %603, %v574
        %v605 = vpop.permute.xlu0 %604
        %608 = vset.pattern.permute.xlu0 0
        %609 = vperm.xlu0 %608, %v575
        %v610 = vpop.permute.xlu0 %609
        %613 = vset.pattern.permute.xlu0 0
        %614 = vperm.xlu0 %613, %v576
        %v615 = vpop.permute.xlu0 %614
        %v618 = vsel %vm412, %v559, 0
        %v621 = vsel %vm412, %v560, 0
        %v624 = vsel %vm412, %v561, 0
        %v627 = vsel %vm412, %v562, 0
        %v630 = vsel %vm412, %v563, 0
        %v633 = vsel %vm412, %v564, 0
        %v636 = vsel %vm412, %v565, 0
        %v639 = vsel %vm412, %v566, 0
        %vm641 = vcmask 1040384
        %v643 = vsel %vm641, %v568, 0
        %645 = vmatprep.subr.mxu0 0.0
        %646 = vmatpush1.msra.mxu0 %v567
        %647 = vmatprep.subr.mxu0 0.0
        %648 = vmatpush1.msra.mxu0 %v643
        %649 = vmatprep.subr.mxu0 0.0
        %650 = vmatpush1.msra.mxu0 0.0
        %651 = vmatprep.subr.mxu0 0.0
        %652 = vmatpush1.msra.mxu0 0.0
        %653 = vmatprep.subr.mxu0 0.0
        %654 = vmatpush1.msra.mxu0 0.0
        %655 = vmatprep.subr.mxu0 0.0
        %656 = vmatpush1.msra.mxu0 0.0
        %657 = vmatprep.subr.mxu0 0.0
        %658 = vmatpush1.msra.mxu0 0.0
        %659 = vmatprep.subr.mxu0 0.0
        %660 = vmatpush1.msra.mxu0 0.0
        %661 = vmatprep.subr.mxu0 0.0
        %662 = vmatpush1.msra.mxu0 0.0
        %663 = vmatprep.subr.mxu0 0.0
        %664 = vmatpush1.msra.mxu0 0.0
        %665 = vmatprep.subr.mxu0 0.0
        %666 = vmatpush1.msra.mxu0 0.0
        %667 = vmatprep.subr.mxu0 0.0
        %668 = vmatpush1.msra.mxu0 0.0
        %669 = vmatprep.subr.mxu0 0.0
        %670 = vmatpush1.msra.mxu0 0.0
        %671 = vmatprep.subr.mxu0 0.0
        %672 = vmatpush1.msra.mxu0 0.0
        %673 = vmatprep.subr.mxu0 0.0
        %674 = vmatpush1.msra.mxu0 0.0
        %675 = vmatprep.subr.mxu0 0.0
        %676 = vmatpush1.msra.mxu0 0.0
        %677 = vmatprep.subr.mxu0 0.0
        %678 = vmatpush1.msra.mxu0 0.0
        %679 = vmatprep.subr.mxu0 0.0
        %680 = vmatpush1.msra.mxu0 0.0
        %681 = vmatprep.subr.mxu0 0.0
        %682 = vmatpush1.msra.mxu0 0.0
        %683 = vmatprep.subr.mxu0 0.0
        %684 = vmatpush1.msra.mxu0 0.0
        %685 = vmatprep.subr.mxu0 0.0
        %686 = vmatpush1.msra.mxu0 0.0
        %687 = vmatprep.subr.mxu0 0.0
        %688 = vmatpush1.msra.mxu0 0.0
        %689 = vmatprep.subr.mxu0 0.0
        %690 = vmatpush1.msra.mxu0 0.0
        %691 = vmatprep.subr.mxu0 0.0
        %692 = vmatpush1.msra.mxu0 0.0
        %693 = vmatprep.subr.mxu0 0.0
        %694 = vmatpush1.msra.mxu0 0.0
        %695 = vmatprep.subr.mxu0 0.0
        %696 = vmatpush1.msra.mxu0 0.0
        %697 = vmatprep.subr.mxu0 0.0
        %698 = vmatpush1.msra.mxu0 0.0
        %699 = vmatprep.subr.mxu0 0.0
        %700 = vmatpush1.msra.mxu0 0.0
        %701 = vmatprep.subr.mxu0 0.0
        %702 = vmatpush1.msra.mxu0 0.0
        %703 = vmatprep.subr.mxu0 0.0
        %704 = vmatpush1.msra.mxu0 0.0
        %705 = vmatprep.subr.mxu0 0.0
        %706 = vmatpush1.msra.mxu0 0.0
        %707 = vmatprep.subr.mxu0 0.0
        %708 = vmatpush1.msra.mxu0 0.0
        %709 = vmatprep.mubr.f32.mxu0 0.0
        %710 = vmatmul.mubr.f32.gmra.mrb[0].mxu0 %v618
        %v711 = vpop.f32.mrb[0].mxu0
        %v712 = vadd.f32 %v580, %v711
        %v713 = vpop.f32.mrb[0].mxu0
        %714 = vmatprep.mubr.f32.mxu0 0.0
        %715 = vmatmul.mubr.f32.gmra.mrb[0].mxu0 %v621
        %v716 = vpop.f32.mrb[0].mxu0
        %v717 = vadd.f32 %v585, %v716
        %v718 = vpop.f32.mrb[0].mxu0
        %719 = vmatprep.mubr.f32.mxu0 0.0
        %720 = vmatmul.mubr.f32.gmra.mrb[0].mxu0 %v624
        %v721 = vpop.f32.mrb[0].mxu0
        %v722 = vadd.f32 %v590, %v721
        %v723 = vpop.f32.mrb[0].mxu0
        %724 = vmatprep.mubr.f32.mxu0 0.0
        %725 = vmatmul.mubr.f32.gmra.mrb[0].mxu0 %v627
        %v726 = vpop.f32.mrb[0].mxu0
        %v727 = vadd.f32 %v595, %v726
        %v728 = vpop.f32.mrb[0].mxu0
        %729 = vmatprep.mubr.f32.mxu0 0.0
        %730 = vmatmul.mubr.f32.gmra.mrb[0].mxu0 %v630
        %v731 = vpop.f32.mrb[0].mxu0
        %v732 = vadd.f32 %v600, %v731
        %v733 = vpop.f32.mrb[0].mxu0
        %734 = vmatprep.mubr.f32.mxu0 0.0
        %735 = vmatmul.mubr.f32.gmra.mrb[0].mxu0 %v633
        %v736 = vpop.f32.mrb[0].mxu0
        %v737 = vadd.f32 %v605, %v736
        %v738 = vpop.f32.mrb[0].mxu0
        %739 = vmatprep.mubr.f32.mxu0 0.0
        %740 = vmatmul.mubr.f32.gmra.mrb[0].mxu0 %v636
        %v741 = vpop.f32.mrb[0].mxu0
        %v742 = vadd.f32 %v610, %v741
        %v743 = vpop.f32.mrb[0].mxu0
        %744 = vmatprep.mubr.f32.mxu0 0.0
        %745 = vmatmul.mubr.f32.gmra.mrb[0].mxu0 %v639
        %v746 = vpop.f32.mrb[0].mxu0
        %v747 = vadd.f32 %v615, %v746
        %v748 = vpop.f32.mrb[0].mxu0
        %749 = vdwg.mxu0
        %vm750 = vcmask 130048
        %751 = vst.msk [vmem:[%s322] sm:$0xff] %vm750, %v712
        %752 = vst.msk [vmem:[%s322 + $0x8] sm:$0xff] %vm750, %v717
        %753 = vst.msk [vmem:[%s322 + $0x10] sm:$0xff] %vm750, %v722
        %754 = vst.msk [vmem:[%s322 + $0x18] sm:$0xff] %vm750, %v727
        %755 = vst.msk [vmem:[%s322 + $0x20] sm:$0xff] %vm750, %v732
        %756 = vst.msk [vmem:[%s322 + $0x28] sm:$0xff] %vm750, %v737
        %757 = vst.msk [vmem:[%s322 + $0x30] sm:$0xff] %vm750, %v742
        %758 = vst.msk [vmem:[%s322 + $0x38] sm:$0xff] %vm750, %v747
        %s759 = sand.u32 %s184, 1
        %s760 = scalar_lea.sflag [#allocation4], %s759
        %s761 = sand.u32 %s184, 1
        %s762 = smul.addr %s761, 64
        %s763 = scalar_lea.vmem [#allocation8], %s762
        // Predicated region
        $region53: #{tpu_custom_call.1} parent=43 // pred_check
          %p764 = pneg %p194
        $region54: #{tpu_custom_call.1} parent=43 // pred_check_branch
          %766 = sbr.rel (%p764) target = $region56
        $region55: #{tpu_custom_call.1} parent=43 // pred_region
          %s767 = smul.u32 2, %s27
          %s769 = ssub.s32 1024, 1024
          %770 = vsyncadd %s760, %s769
          %s771 = smul.addr %s26, 8
          %s772 = sadd.s32 %s767, %s771
          %s773 = smul.addr %s772, 128
          %s774 = scalar_lea.hbm %s6, %s773
          %s775 = sshll.u32 %s763, 4
          %s776 = int_to_ptr.vmem [resolvable:$true] %s775
          %781 = dma.vmem_to_hbm [thread:$0]  %s776, 1024, %s774, %s760, 128, 128, 8
        $region56: #{tpu_custom_call.1} parent=43 // pred_fallthru
          _
      $region44: #{tpu_custom_call.1} parent=5 // pred_fallthru
        _
      %p782 = scmp.le.s32.totalorder 2, %s17
      // Predicated region
      $region57: #{tpu_custom_call.1} parent=5 // pred_check
        %p783 = pneg %p782
      $region58: #{tpu_custom_call.1} parent=5 // pred_check_branch
        %785 = sbr.rel (%p783) target = $region60
      $region59: #{tpu_custom_call.1} parent=5 // pred_region
        %s786 = ssub.s32 %s17, 2
        // Predicated region
        $region61: #{tpu_custom_call.1} parent=59 // pred_check
          %p787 = pneg %p200
        $region62: #{tpu_custom_call.1} parent=59 // pred_check_branch
          %789 = sbr.rel (%p787) target = $region64
        $region63: #{tpu_custom_call.1} parent=59 // pred_region
          %s790 = sand.u32 %s185, 1
          %s791 = scalar_lea.sflag [#allocation4], %s790
          %s792 = sand.u32 %s185, 1
          %s793 = smul.addr %s792, 64
          %s794 = scalar_lea.vmem [#allocation8], %s793
          %795 = dma.done %s791, 1024
        $region64: #{tpu_custom_call.1} parent=59 // pred_fallthru
          _
      $region60: #{tpu_custom_call.1} parent=5 // pred_fallthru
        _
    $region6: #{tpu_custom_call.1} parent=1 // loop_footer
      %s21 = sadd.s32 1, %s17
    $region7: #{tpu_custom_call.1} parent=1 // loop_footer_branch
      %16 = sbr.rel target = $region3
    $region8: #{tpu_custom_call.1} parent=1 // loop_exit
      _
    %796 = vsyncpa [#allocation4], 1
    %s797 = scalar_lea.sflag [#allocation4], 1
    %798 = vsyncpa %s797, 1
    %799 = vsyncpa [#allocation5], 1
    %s800 = scalar_lea.sflag [#allocation5], 1
    %801 = vsyncpa %s800, 1
    %802 = vsyncpa [#allocation7], 1

</llo_original>
